<compile_context>
chip_gen: v7x
topology: tpu7x:2x2x1
jax: 0.10.0
libtpu: 0.0.40
codegen_flags: <defaults>
</compile_context>

<pallas_src>
import jax
import jax.numpy as jnp
from jax.experimental import pallas as pl
from jax.experimental.pallas import tpu as pltpu


# Problems whose full operand+output set is at most this many bytes skip the
# grid entirely (everything lives in VMEM for a single kernel invocation).
_SMALL_PROBLEM_BYTES = 4 * 1024 * 1024


def _linear_bias_fused_kernel(x_ref, w_ref, b_ref, y_ref):
    """No-grid fast path: whole problem in VMEM, single MXU matmul + bias."""
    acc = jnp.dot(x_ref[...], w_ref[...], preferred_element_type=jnp.float32)
    y_ref[...] = (acc + b_ref[...].astype(jnp.float32)).astype(y_ref.dtype)


def _linear_bias_tiled_kernel(x_ref, w_ref, b_ref, y_ref, acc_ref):
    """One K-tile step of y = x @ w + b with an f32 VMEM accumulator."""
    k = pl.program_id(2)

    @pl.when(k == 0)
    def _init():
        # Fold the bias into the accumulator init: removes a tm x tn VPU add
        # and a cast from the finalize epilogue (which otherwise sits in dead
        # cycles after the last vmatmul of the K loop).
        acc_ref[...] = pl.broadcast_to(
            b_ref[...].astype(jnp.float32), acc_ref.shape
        )

    acc_ref[...] += jnp.dot(
        x_ref[...], w_ref[...], preferred_element_type=jnp.float32
    )

    @pl.when(k == pl.num_programs(2) - 1)
    def _finalize():
        y_ref[...] = acc_ref[...].astype(y_ref.dtype)


def _pick_tile(dim, target):
    """Largest tile <= target that evenly divides `dim`.

    Falls back to the full axis (always a legal block shape) when no aligned
    divisor exists, instead of asserting like the previous version.
    """
    if dim <= target:
        return dim
    for t in (target, 512, 256, 128):
        if t <= target and dim % t == 0:
            return t
    return dim


def _try_halve(t, dim, align):
    """Halve a tile if the result stays aligned and still divides `dim`."""
    h = t // 2
    if h >= align and h % align == 0 and dim % h == 0:
        return h
    return t


def linear_head(x, w, b, *, tm=512, tn=512, tk=512, force_grid=False):
    """Pallas linear head: y = x @ w + b.

    x: [M, K], w: [K, N], b: [1, N] -> y: [M, N] (x.dtype).

    Small problems take the no-grid VMEM-resident path; larger problems use
    the tiled (M, N, K) grid with 512-class tiles (full MXU column fill on
    v6e/v7x, ~7 MiB double-buffered footprint — inside every generation's
    scoped-VMEM default, including v7x's 64 MiB physical VMEM).
    """
    M, K = x.shape
    K2, N = w.shape
    assert K == K2 and b.shape == (1, N)

    out_shape = jax.ShapeDtypeStruct((M, N), x.dtype)
    io_bytes = (
        x.size * x.dtype.itemsize
        + w.size * w.dtype.itemsize
        + b.size * b.dtype.itemsize
        + M * N * x.dtype.itemsize
    )

    if io_bytes <= _SMALL_PROBLEM_BYTES and not force_grid:
        # ---- no-grid fast path ----
        cost = pl.CostEstimate(
            flops=2 * M * K * N, transcendentals=0, bytes_accessed=io_bytes
        )
        return pl.pallas_call(
            _linear_bias_fused_kernel,
            out_shape=out_shape,
            cost_estimate=cost,
        )(x, w, b)

    # ---- tiled path ----
    tm = _pick_tile(M, tm)
    tn = _pick_tile(N, tn)
    tk = _pick_tile(K, tk)

    # v7x megacore: make sure the parallel axes produce >=2 blocks so both
    # TensorCores get work (no-op on single-core v5e/v6e).
    if (M // tm) * (N // tn) < 2:
        new_tn = _try_halve(tn, N, 128)
        if new_tn != tn:
            tn = new_tn
        else:
            tm = _try_halve(tm, M, 16)

    grid = (M // tm, N // tn, K // tk)

    # Bytes include tiling re-reads: x is read once per N-block, w once per
    # M-block, b once per output tile row-block.
    cost = pl.CostEstimate(
        flops=2 * M * K * N,
        transcendentals=0,
        bytes_accessed=(
            x.size * x.dtype.itemsize * (N // tn)
            + w.size * w.dtype.itemsize * (M // tm)
            + b.size * b.dtype.itemsize * (M // tm)
            + M * N * x.dtype.itemsize
        ),
    )

    return pl.pallas_call(
        _linear_bias_tiled_kernel,
        out_shape=out_shape,
        grid_spec=pltpu.PrefetchScalarGridSpec(
            num_scalar_prefetch=0,
            grid=grid,
            in_specs=[
                pl.BlockSpec((tm, tk), lambda i, j, k: (i, k)),  # x
                pl.BlockSpec((tk, tn), lambda i, j, k: (k, j)),  # w
                pl.BlockSpec((1, tn), lambda i, j, k: (0, j)),   # b
            ],
            out_specs=pl.BlockSpec((tm, tn), lambda i, j, k: (i, j)),
            scratch_shapes=[pltpu.VMEM((tm, tn), jnp.float32)],
        ),
        compiler_params=pltpu.CompilerParams(
            dimension_semantics=("parallel", "parallel", "arbitrary")
        ),
        cost_estimate=cost,
    )(x, w, b)


def apply_wrapper_forward(x, head_params, forward_pos=1):
    """ApplyWrapper.forward: res = wrapped(x); return res[forward_pos].

    `forward_pos` is a static attribute in the PyTorch spec, so the tuple
    indexing is resolved at trace time and only the selected head's linear is
    ever computed / DMA'd.  If all heads were genuinely needed at once, the
    right structure would be a single fused [D, sum(H_i)] matmul sliced in the
    wrapper, not per-head kernels.
    """
    w, b = head_params[forward_pos]
    return linear_head(x, w, b)


def init_params(key, d_in, d_hidden, dtype=jnp.bfloat16):
    """Two linear heads (mimics nn.Linear-style scaled normals)."""
    keys = jax.random.split(key, 4)
    scale = 1.0 / float(d_in) ** 0.5
    heads = []
    for i in range(2):
        w = (jax.random.normal(keys[2 * i], (d_in, d_hidden), jnp.float32)
             * scale).astype(dtype)
        b = (jax.random.normal(keys[2 * i + 1], (1, d_hidden), jnp.float32)
             * 0.01).astype(dtype)
        heads.append((w, b))
    return tuple(heads)


if __name__ == "__main__":
    key = jax.random.PRNGKey(0)
    kx, kp, kx2, kw2, kb2 = jax.random.split(key, 5)

    # --- ApplyWrapper demo shape: takes the no-grid fast path ---
    # Batch a multiple of 16 (bf16 sublane packing), feature dims multiples
    # of 128 (lane-dense loads / unmasked output stores, full MXU columns).
    B, D, H = 128, 256, 256
    dtype = jnp.bfloat16  # bf16-native MXU on v6e/v7x; f32 accumulation inside.

    x = jax.random.normal(kx, (B, D), jnp.float32).astype(dtype)
    heads = init_params(kp, D, H, dtype=dtype)

    out = apply_wrapper_forward(x, heads, forward_pos=1)
    out = jax.block_until_ready(out)

    w1, b1 = heads[1]
    ref = (
        jnp.dot(
            x.astype(jnp.float32),
            w1.astype(jnp.float32),
            precision=jax.lax.Precision.HIGHEST,
        )
        + b1.astype(jnp.float32)
    )
    assert out.shape == (B, H)
    assert jnp.allclose(out.astype(jnp.float32), ref, atol=2e-2, rtol=2e-2)

    # --- Also exercise the tiled grid path (what large shapes use) ---
    M2, K2, N2 = 256, 512, 512
    x2 = jax.random.normal(kx2, (M2, K2), jnp.float32).astype(dtype)
    w2 = (jax.random.normal(kw2, (K2, N2), jnp.float32)
          * (1.0 / float(K2) ** 0.5)).astype(dtype)
    b2 = (jax.random.normal(kb2, (1, N2), jnp.float32) * 0.01).astype(dtype)

    out2 = linear_head(x2, w2, b2, force_grid=True)
    out2 = jax.block_until_ready(out2)
    ref2 = (
        jnp.dot(
            x2.astype(jnp.float32),
            w2.astype(jnp.float32),
            precision=jax.lax.Precision.HIGHEST,
        )
        + b2.astype(jnp.float32)
    )
    assert out2.shape == (M2, N2)
    assert jnp.allclose(out2.astype(jnp.float32), ref2, atol=3e-2, rtol=3e-2)

    print("KERNEL_OK")
</pallas_src>

<mosaic_0001>
module attributes {stable_mosaic.version = 11 : i64} {
  func.func @_linear_bias_fused_kernel(%arg0: memref<128x256xbf16, #tpu.memory_space<vmem>>, %arg1: memref<256x256xbf16, #tpu.memory_space<vmem>>, %arg2: memref<1x256xbf16, #tpu.memory_space<vmem>>, %arg3: memref<128x256xbf16, #tpu.memory_space<vmem>>) attributes {dimension_semantics = [], scalar_prefetch = 0 : i64, scratch_operands = 0 : i64, tpu.core_type = #tpu.core_type<tc>} {
    %c0 = arith.constant 0 : index
    %c0_0 = arith.constant 0 : index
    %0 = vector.load %arg0[%c0, %c0_0] : memref<128x256xbf16, #tpu.memory_space<vmem>>, vector<128x256xbf16>
    %c0_1 = arith.constant 0 : index
    %c0_2 = arith.constant 0 : index
    %1 = vector.load %arg1[%c0_1, %c0_2] : memref<256x256xbf16, #tpu.memory_space<vmem>>, vector<256x256xbf16>
    %cst = arith.constant dense<0.000000e+00> : vector<128x256xf32>
    %2 = tpu.matmul %0, %1, %cst {dimension_numbers = #tpu.dot_dimension_numbers<[1], [0], [0], [1], [0, 0, 1, 1], [], []>} : vector<128x256xbf16>, vector<256x256xbf16>, vector<128x256xf32> -> vector<128x256xf32>
    %c0_3 = arith.constant 0 : index
    %c0_4 = arith.constant 0 : index
    %3 = vector.load %arg2[%c0_3, %c0_4] : memref<1x256xbf16, #tpu.memory_space<vmem>>, vector<1x256xbf16>
    %4 = arith.extf %3 : vector<1x256xbf16> to vector<1x256xf32>
    %5 = vector.broadcast %4 : vector<1x256xf32> to vector<128x256xf32>
    %6 = arith.addf %2, %5 : vector<128x256xf32>
    %7 = arith.truncf %6 : vector<128x256xf32> to vector<128x256xbf16>
    %c0_5 = arith.constant 0 : index
    %c0_6 = arith.constant 0 : index
    %8 = vector.load %arg3[%c0_5, %c0_6] : memref<128x256xbf16, #tpu.memory_space<vmem>>, vector<128x256xbf16>
    tpu.vector_store %arg3[%c0_5, %c0_6], %7 {strides = array<i32>} : memref<128x256xbf16, #tpu.memory_space<vmem>>, vector<128x256xbf16>,
    return
  }
}

</mosaic_0001>

<llo_original>
// kernel: tpu_custom_call.1
$region0: #{tpu_custom_call.1}
  #allocation0 [shape = 'u32[]', space=smem, size = 0x4, offset = 0x4, fixed_abs, tag = 'smem constant byte address 0x4 - core index']
  #allocation1 [shape = 'u32[144,128]{1,0:T(1,128)}', space=vmem, size = 0x12000, scoped, tag = 'internal scratch']
  %s0 = inlined_call_operand.hbm [shape: bf16[128,256], index: 0, kind: input, shape index: {}]
  %s1 = inlined_call_operand.hbm [shape: bf16[256,256], index: 1, kind: input, shape index: {}]
  %s2 = inlined_call_operand.vmem [shape: bf16[1,256], index: 2, kind: input, shape index: {}]
  %s3 = inlined_call_operand.hbm [shape: bf16[128,256], index: 3, kind: output, shape index: {}]
  %s4 = sld [smem:[#allocation0]]
  $region30: #{tpu_custom_call.1} parent=0
    _
  %s6 = ssub.s32 1, %s4
  %s7 = scalar_select 0, %s6, %s4
  $region1: #{tpu_custom_call.1} parent=0
    #allocation2 [shape = 'u8[65536]{0}', space=vmem, size = 0x10000, scoped, tag = 'input window, operand 0, single buffered']
    #allocation3 [shape = 's32[1]{0}', space=sflag, size = 0x4, scoped, tag = 'scoped memory for tpu_custom_call.1']
    #allocation4 [shape = 's32[1]{0}', space=sflag, size = 0x4, scoped, tag = 'scoped memory for tpu_custom_call.1']
    #allocation5 [shape = 'u8[131072]{0}', space=vmem, size = 0x20000, scoped, tag = 'input window, operand 1, single buffered']
    #allocation6 [shape = 's32[1]{0}', space=sflag, size = 0x4, scoped, tag = 'scoped memory for tpu_custom_call.1']
    #allocation7 [shape = 'u8[65536]{0}', space=vmem, size = 0x10000, scoped, tag = 'output window, operand 0, single buffered']
    %8 = vsyncpa [#allocation3], 0
    %9 = vsyncpa [#allocation6], 0
    %10 = vsyncpa [#allocation4], 0
    // Predicated region
    $region2: #{tpu_custom_call.1} parent=1 // pred_check
      _
    $region3: #{tpu_custom_call.1} parent=1 // pred_check_branch
      %12 = sbr.rel (0) target = $region5
    $region4: #{tpu_custom_call.1} parent=1 // pred_region
      %s14 = ssub.s32 2048, 2048
      %15 = vsyncadd [#allocation3], %s14
      %s16 = sshll.u32 [#allocation2], 4
      %s17 = int_to_ptr.vmem [resolvable:$true] %s16
      %22 = dma.hbm_to_vmem [thread:$0]  %s0, 2048, %s17, [#allocation3], 128, 128, 8
    $region5: #{tpu_custom_call.1} parent=1 // pred_fallthru
      _
    // Predicated region
    $region6: #{tpu_custom_call.1} parent=1 // pred_check
      _
    $region7: #{tpu_custom_call.1} parent=1 // pred_check_branch
      %24 = sbr.rel (0) target = $region9
    $region8: #{tpu_custom_call.1} parent=1 // pred_region
      %s26 = ssub.s32 4096, 4096
      %27 = vsyncadd [#allocation6], %s26
      %s28 = sshll.u32 [#allocation5], 4
      %s29 = int_to_ptr.vmem [resolvable:$true] %s28
      %34 = dma.hbm_to_vmem [thread:$0]  %s1, 4096, %s29, [#allocation6], 128, 128, 8
    $region9: #{tpu_custom_call.1} parent=1 // pred_fallthru
      _
    // Predicated region
    $region10: #{tpu_custom_call.1} parent=1 // pred_check
      _
    $region11: #{tpu_custom_call.1} parent=1 // pred_check_branch
      %36 = sbr.rel (0) target = $region13
    $region12: #{tpu_custom_call.1} parent=1 // pred_region
      _
    $region13: #{tpu_custom_call.1} parent=1 // pred_fallthru
      _
    // Predicated region
    $region14: #{tpu_custom_call.1} parent=1 // pred_check
      _
    $region15: #{tpu_custom_call.1} parent=1 // pred_check_branch
      %38 = sbr.rel (0) target = $region17
    $region16: #{tpu_custom_call.1} parent=1 // pred_region
      %39 = dma.done [#allocation3], 2048
    $region17: #{tpu_custom_call.1} parent=1 // pred_fallthru
      _
    // Predicated region
    $region18: #{tpu_custom_call.1} parent=1 // pred_check
      _
    $region19: #{tpu_custom_call.1} parent=1 // pred_check_branch
      %41 = sbr.rel (0) target = $region21
    $region20: #{tpu_custom_call.1} parent=1 // pred_region
      %42 = dma.done [#allocation6], 4096
    $region21: #{tpu_custom_call.1} parent=1 // pred_fallthru
      _
    %v43 = vld [vmem:[#allocation2] sm:$0xff]
    %v44 = vld [vmem:[#allocation2 + $0x8] sm:$0xff]
    %v45 = vld [vmem:[#allocation2 + $0x10] sm:$0xff]
    %v46 = vld [vmem:[#allocation2 + $0x18] sm:$0xff]
    %v47 = vld [vmem:[#allocation2 + $0x20] sm:$0xff]
    %v48 = vld [vmem:[#allocation2 + $0x28] sm:$0xff]
    %v49 = vld [vmem:[#allocation2 + $0x30] sm:$0xff]
    %v50 = vld [vmem:[#allocation2 + $0x38] sm:$0xff]
    %v51 = vld [vmem:[#allocation2 + $0x40] sm:$0xff]
    %v52 = vld [vmem:[#allocation2 + $0x48] sm:$0xff]
    %v53 = vld [vmem:[#allocation2 + $0x50] sm:$0xff]
    %v54 = vld [vmem:[#allocation2 + $0x58] sm:$0xff]
    %v55 = vld [vmem:[#allocation2 + $0x60] sm:$0xff]
    %v56 = vld [vmem:[#allocation2 + $0x68] sm:$0xff]
    %v57 = vld [vmem:[#allocation2 + $0x70] sm:$0xff]
    %v58 = vld [vmem:[#allocation2 + $0x78] sm:$0xff]
    %v59 = vld [vmem:[#allocation5] sm:$0xff]
    %v60 = vld [vmem:[#allocation5 + $0x8] sm:$0xff]
    %v61 = vld [vmem:[#allocation5 + $0x10] sm:$0xff]
    %v62 = vld [vmem:[#allocation5 + $0x18] sm:$0xff]
    %v63 = vld [vmem:[#allocation5 + $0x20] sm:$0xff]
    %v64 = vld [vmem:[#allocation5 + $0x28] sm:$0xff]
    %v65 = vld [vmem:[#allocation5 + $0x30] sm:$0xff]
    %v66 = vld [vmem:[#allocation5 + $0x38] sm:$0xff]
    %v67 = vld [vmem:[#allocation5 + $0x40] sm:$0xff]
    %v68 = vld [vmem:[#allocation5 + $0x48] sm:$0xff]
    %v69 = vld [vmem:[#allocation5 + $0x50] sm:$0xff]
    %v70 = vld [vmem:[#allocation5 + $0x58] sm:$0xff]
    %v71 = vld [vmem:[#allocation5 + $0x60] sm:$0xff]
    %v72 = vld [vmem:[#allocation5 + $0x68] sm:$0xff]
    %v73 = vld [vmem:[#allocation5 + $0x70] sm:$0xff]
    %v74 = vld [vmem:[#allocation5 + $0x78] sm:$0xff]
    %v75 = vld [vmem:[#allocation5 + $0x80] sm:$0xff]
    %v76 = vld [vmem:[#allocation5 + $0x88] sm:$0xff]
    %v77 = vld [vmem:[#allocation5 + $0x90] sm:$0xff]
    %v78 = vld [vmem:[#allocation5 + $0x98] sm:$0xff]
    %v79 = vld [vmem:[#allocation5 + $0xa0] sm:$0xff]
    %v80 = vld [vmem:[#allocation5 + $0xa8] sm:$0xff]
    %v81 = vld [vmem:[#allocation5 + $0xb0] sm:$0xff]
    %v82 = vld [vmem:[#allocation5 + $0xb8] sm:$0xff]
    %v83 = vld [vmem:[#allocation5 + $0xc0] sm:$0xff]
    %v84 = vld [vmem:[#allocation5 + $0xc8] sm:$0xff]
    %v85 = vld [vmem:[#allocation5 + $0xd0] sm:$0xff]
    %v86 = vld [vmem:[#allocation5 + $0xd8] sm:$0xff]
    %v87 = vld [vmem:[#allocation5 + $0xe0] sm:$0xff]
    %v88 = vld [vmem:[#allocation5 + $0xe8] sm:$0xff]
    %v89 = vld [vmem:[#allocation5 + $0xf0] sm:$0xff]
    %v90 = vld [vmem:[#allocation5 + $0xf8] sm:$0xff]
    %v91 = vld [vmem:[%s2] sm:$0x3]
    %v92 = vunpack.c.l.bf16 %v91
    %v94 = vlaneseq
    %v95 = vshrl.u32 %v94, 7
    %v96 = vsub.s32 0, %v95
    %v97 = vrot.slane %v92, %v96
    %v98 = vlaneseq
    %v99 = vshrl.u32 %v98, 7
    %v100 = vsub.s32 2, %v99
    %v101 = vrot.slane %v92, %v100
    %v104 = vlaneseq
    %v105 = vshrl.u32 %v104, 7
    %v106 = vsub.s32 0, %v105
    %v107 = vrot.slane %v97, %v106
    %v108 = vlaneseq
    %v109 = vshrl.u32 %v108, 7
    %v110 = vsub.s32 0, %v109
    %v111 = vrot.slane %v101, %v110
    %v128 = vunpack.c.l.b16 %v43
    %v129 = vunpack.c.h.b16 %v43
    %v130 = vunpack.c.l.b16 %v44
    %v131 = vunpack.c.h.b16 %v44
    %v132 = vunpack.c.l.b16 %v45
    %v133 = vunpack.c.h.b16 %v45
    %v134 = vunpack.c.l.b16 %v46
    %v135 = vunpack.c.h.b16 %v46
    %v136 = vunpack.c.l.b16 %v47
    %v137 = vunpack.c.h.b16 %v47
    %v138 = vunpack.c.l.b16 %v48
    %v139 = vunpack.c.h.b16 %v48
    %v140 = vunpack.c.l.b16 %v49
    %v141 = vunpack.c.h.b16 %v49
    %v142 = vunpack.c.l.b16 %v50
    %v143 = vunpack.c.h.b16 %v50
    %v144 = vunpack.c.l.b16 %v51
    %v145 = vunpack.c.h.b16 %v51
    %v146 = vunpack.c.l.b16 %v52
    %v147 = vunpack.c.h.b16 %v52
    %v148 = vunpack.c.l.b16 %v53
    %v149 = vunpack.c.h.b16 %v53
    %v150 = vunpack.c.l.b16 %v54
    %v151 = vunpack.c.h.b16 %v54
    %v152 = vunpack.c.l.b16 %v55
    %v153 = vunpack.c.h.b16 %v55
    %v154 = vunpack.c.l.b16 %v56
    %v155 = vunpack.c.h.b16 %v56
    %v156 = vunpack.c.l.b16 %v57
    %v157 = vunpack.c.h.b16 %v57
    %v158 = vunpack.c.l.b16 %v58
    %v159 = vunpack.c.h.b16 %v58
    %v160 = vpack.c.b16 %v130, %v128
    %v161 = vpack.c.b16 %v131, %v129
    %v162 = vpack.c.b16 %v134, %v132
    %v163 = vpack.c.b16 %v135, %v133
    %v164 = vpack.c.b16 %v138, %v136
    %v165 = vpack.c.b16 %v139, %v137
    %v166 = vpack.c.b16 %v142, %v140
    %v167 = vpack.c.b16 %v143, %v141
    %v168 = vpack.c.b16 %v146, %v144
    %v169 = vpack.c.b16 %v147, %v145
    %v170 = vpack.c.b16 %v150, %v148
    %v171 = vpack.c.b16 %v151, %v149
    %v172 = vpack.c.b16 %v154, %v152
    %v173 = vpack.c.b16 %v155, %v153
    %v174 = vpack.c.b16 %v158, %v156
    %v175 = vpack.c.b16 %v159, %v157
    %v224 = vunpack.c.l.b16 %v59
    %v225 = vunpack.c.h.b16 %v59
    %v226 = vunpack.c.l.b16 %v60
    %v227 = vunpack.c.h.b16 %v60
    %v228 = vunpack.c.l.b16 %v61
    %v229 = vunpack.c.h.b16 %v61
    %v230 = vunpack.c.l.b16 %v62
    %v231 = vunpack.c.h.b16 %v62
    %v232 = vunpack.c.l.b16 %v63
    %v233 = vunpack.c.h.b16 %v63
    %v234 = vunpack.c.l.b16 %v64
    %v235 = vunpack.c.h.b16 %v64
    %v236 = vunpack.c.l.b16 %v65
    %v237 = vunpack.c.h.b16 %v65
    %v238 = vunpack.c.l.b16 %v66
    %v239 = vunpack.c.h.b16 %v66
    %v240 = vunpack.c.l.b16 %v67
    %v241 = vunpack.c.h.b16 %v67
    %v242 = vunpack.c.l.b16 %v68
    %v243 = vunpack.c.h.b16 %v68
    %v244 = vunpack.c.l.b16 %v69
    %v245 = vunpack.c.h.b16 %v69
    %v246 = vunpack.c.l.b16 %v70
    %v247 = vunpack.c.h.b16 %v70
    %v248 = vunpack.c.l.b16 %v71
    %v249 = vunpack.c.h.b16 %v71
    %v250 = vunpack.c.l.b16 %v72
    %v251 = vunpack.c.h.b16 %v72
    %v252 = vunpack.c.l.b16 %v73
    %v253 = vunpack.c.h.b16 %v73
    %v254 = vunpack.c.l.b16 %v74
    %v255 = vunpack.c.h.b16 %v74
    %v256 = vunpack.c.l.b16 %v75
    %v257 = vunpack.c.h.b16 %v75
    %v258 = vunpack.c.l.b16 %v76
    %v259 = vunpack.c.h.b16 %v76
    %v260 = vunpack.c.l.b16 %v77
    %v261 = vunpack.c.h.b16 %v77
    %v262 = vunpack.c.l.b16 %v78
    %v263 = vunpack.c.h.b16 %v78
    %v264 = vunpack.c.l.b16 %v79
    %v265 = vunpack.c.h.b16 %v79
    %v266 = vunpack.c.l.b16 %v80
    %v267 = vunpack.c.h.b16 %v80
    %v268 = vunpack.c.l.b16 %v81
    %v269 = vunpack.c.h.b16 %v81
    %v270 = vunpack.c.l.b16 %v82
    %v271 = vunpack.c.h.b16 %v82
    %v272 = vunpack.c.l.b16 %v83
    %v273 = vunpack.c.h.b16 %v83
    %v274 = vunpack.c.l.b16 %v84
    %v275 = vunpack.c.h.b16 %v84
    %v276 = vunpack.c.l.b16 %v85
    %v277 = vunpack.c.h.b16 %v85
    %v278 = vunpack.c.l.b16 %v86
    %v279 = vunpack.c.h.b16 %v86
    %v280 = vunpack.c.l.b16 %v87
    %v281 = vunpack.c.h.b16 %v87
    %v282 = vunpack.c.l.b16 %v88
    %v283 = vunpack.c.h.b16 %v88
    %v284 = vunpack.c.l.b16 %v89
    %v285 = vunpack.c.h.b16 %v89
    %v286 = vunpack.c.l.b16 %v90
    %v287 = vunpack.c.h.b16 %v90
    %v288 = vpack.c.b16 %v226, %v224
    %v289 = vpack.c.b16 %v227, %v225
    %v290 = vpack.c.b16 %v230, %v228
    %v291 = vpack.c.b16 %v231, %v229
    %v292 = vpack.c.b16 %v234, %v232
    %v293 = vpack.c.b16 %v235, %v233
    %v294 = vpack.c.b16 %v238, %v236
    %v295 = vpack.c.b16 %v239, %v237
    %v296 = vpack.c.b16 %v242, %v240
    %v297 = vpack.c.b16 %v243, %v241
    %v298 = vpack.c.b16 %v246, %v244
    %v299 = vpack.c.b16 %v247, %v245
    %v300 = vpack.c.b16 %v250, %v248
    %v301 = vpack.c.b16 %v251, %v249
    %v302 = vpack.c.b16 %v254, %v252
    %v303 = vpack.c.b16 %v255, %v253
    %v304 = vpack.c.b16 %v258, %v256
    %v305 = vpack.c.b16 %v259, %v257
    %v306 = vpack.c.b16 %v262, %v260
    %v307 = vpack.c.b16 %v263, %v261
    %v308 = vpack.c.b16 %v266, %v264
    %v309 = vpack.c.b16 %v267, %v265
    %v310 = vpack.c.b16 %v270, %v268
    %v311 = vpack.c.b16 %v271, %v269
    %v312 = vpack.c.b16 %v274, %v272
    %v313 = vpack.c.b16 %v275, %v273
    %v314 = vpack.c.b16 %v278, %v276
    %v315 = vpack.c.b16 %v279, %v277
    %v316 = vpack.c.b16 %v282, %v280
    %v317 = vpack.c.b16 %v283, %v281
    %v318 = vpack.c.b16 %v286, %v284
    %v319 = vpack.c.b16 %v287, %v285
    %352 = vmatprep.subr.bf16.mxu0 %v289
    %353 = vmatpush1.bf16.msra.mxu0 %v288
    %354 = vmatprep.subr.bf16.mxu0 %v291
    %355 = vmatpush1.bf16.msra.mxu0 %v290
    %356 = vmatprep.subr.bf16.mxu0 %v293
    %357 = vmatpush1.bf16.msra.mxu0 %v292
    %358 = vmatprep.subr.bf16.mxu0 %v295
    %359 = vmatpush1.bf16.msra.mxu0 %v294
    %360 = vmatprep.subr.bf16.mxu0 %v297
    %361 = vmatpush1.bf16.msra.mxu0 %v296
    %362 = vmatprep.subr.bf16.mxu0 %v299
    %363 = vmatpush1.bf16.msra.mxu0 %v298
    %364 = vmatprep.subr.bf16.mxu0 %v301
    %365 = vmatpush1.bf16.msra.mxu0 %v300
    %366 = vmatprep.subr.bf16.mxu0 %v303
    %367 = vmatpush1.bf16.msra.mxu0 %v302
    %368 = vmatprep.subr.bf16.mxu0 %v305
    %369 = vmatpush1.bf16.msra.mxu0 %v304
    %370 = vmatprep.subr.bf16.mxu0 %v307
    %371 = vmatpush1.bf16.msra.mxu0 %v306
    %372 = vmatprep.subr.bf16.mxu0 %v309
    %373 = vmatpush1.bf16.msra.mxu0 %v308
    %374 = vmatprep.subr.bf16.mxu0 %v311
    %375 = vmatpush1.bf16.msra.mxu0 %v310
    %376 = vmatprep.subr.bf16.mxu0 %v313
    %377 = vmatpush1.bf16.msra.mxu0 %v312
    %378 = vmatprep.subr.bf16.mxu0 %v315
    %379 = vmatpush1.bf16.msra.mxu0 %v314
    %380 = vmatprep.subr.bf16.mxu0 %v317
    %381 = vmatpush1.bf16.msra.mxu0 %v316
    %382 = vmatprep.subr.bf16.mxu0 %v319
    %383 = vmatpush1.bf16.msra.mxu0 %v318
    %384 = vmatprep.mubr.bf16.mxu0 %v161
    %385 = vmatmul.mubr.bf16.gmra.mrb[0].mxu0 %v160
    %v386 = vpop.f32.mrb[0].mxu0
    %v387 = vadd.f32 %v107, %v386
    %v388 = vpop.f32.mrb[0].mxu0
    %v389 = vadd.f32 %v111, %v388
    %v390 = vpop.f32.mrb[0].mxu0
    %v391 = vadd.f32 %v107, %v390
    %v392 = vpop.f32.mrb[0].mxu0
    %v393 = vadd.f32 %v111, %v392
    %394 = vmatprep.mubr.bf16.mxu0 %v163
    %395 = vmatmul.mubr.bf16.gmra.mrb[0].mxu0 %v162
    %v396 = vpop.f32.mrb[0].mxu0
    %v397 = vadd.f32 %v107, %v396
    %v398 = vpop.f32.mrb[0].mxu0
    %v399 = vadd.f32 %v111, %v398
    %v400 = vpop.f32.mrb[0].mxu0
    %v401 = vadd.f32 %v107, %v400
    %v402 = vpop.f32.mrb[0].mxu0
    %v403 = vadd.f32 %v111, %v402
    %404 = vmatprep.mubr.bf16.mxu0 %v165
    %405 = vmatmul.mubr.bf16.gmra.mrb[0].mxu0 %v164
    %v406 = vpop.f32.mrb[0].mxu0
    %v407 = vadd.f32 %v107, %v406
    %v408 = vpop.f32.mrb[0].mxu0
    %v409 = vadd.f32 %v111, %v408
    %v410 = vpop.f32.mrb[0].mxu0
    %v411 = vadd.f32 %v107, %v410
    %v412 = vpop.f32.mrb[0].mxu0
    %v413 = vadd.f32 %v111, %v412
    %414 = vmatprep.mubr.bf16.mxu0 %v167
    %415 = vmatmul.mubr.bf16.gmra.mrb[0].mxu0 %v166
    %v416 = vpop.f32.mrb[0].mxu0
    %v417 = vadd.f32 %v107, %v416
    %v418 = vpop.f32.mrb[0].mxu0
    %v419 = vadd.f32 %v111, %v418
    %v420 = vpop.f32.mrb[0].mxu0
    %v421 = vadd.f32 %v107, %v420
    %v422 = vpop.f32.mrb[0].mxu0
    %v423 = vadd.f32 %v111, %v422
    %424 = vmatprep.mubr.bf16.mxu0 %v169
    %425 = vmatmul.mubr.bf16.gmra.mrb[0].mxu0 %v168
    %v426 = vpop.f32.mrb[0].mxu0
    %v427 = vadd.f32 %v107, %v426
    %v428 = vpop.f32.mrb[0].mxu0
    %v429 = vadd.f32 %v111, %v428
    %v430 = vpop.f32.mrb[0].mxu0
    %v431 = vadd.f32 %v107, %v430
    %v432 = vpop.f32.mrb[0].mxu0
    %v433 = vadd.f32 %v111, %v432
    %434 = vmatprep.mubr.bf16.mxu0 %v171
    %435 = vmatmul.mubr.bf16.gmra.mrb[0].mxu0 %v170
    %v436 = vpop.f32.mrb[0].mxu0
    %v437 = vadd.f32 %v107, %v436
    %v438 = vpop.f32.mrb[0].mxu0
    %v439 = vadd.f32 %v111, %v438
    %v440 = vpop.f32.mrb[0].mxu0
    %v441 = vadd.f32 %v107, %v440
    %v442 = vpop.f32.mrb[0].mxu0
    %v443 = vadd.f32 %v111, %v442
    %444 = vmatprep.mubr.bf16.mxu0 %v173
    %445 = vmatmul.mubr.bf16.gmra.mrb[0].mxu0 %v172
    %v446 = vpop.f32.mrb[0].mxu0
    %v447 = vadd.f32 %v107, %v446
    %v448 = vpop.f32.mrb[0].mxu0
    %v449 = vadd.f32 %v111, %v448
    %v450 = vpop.f32.mrb[0].mxu0
    %v451 = vadd.f32 %v107, %v450
    %v452 = vpop.f32.mrb[0].mxu0
    %v453 = vadd.f32 %v111, %v452
    %454 = vmatprep.mubr.bf16.mxu0 %v175
    %455 = vmatmul.mubr.bf16.gmra.mrb[0].mxu0 %v174
    %v456 = vpop.f32.mrb[0].mxu0
    %v457 = vadd.f32 %v107, %v456
    %v458 = vpop.f32.mrb[0].mxu0
    %v459 = vadd.f32 %v111, %v458
    %v460 = vpop.f32.mrb[0].mxu0
    %v461 = vadd.f32 %v107, %v460
    %v462 = vpop.f32.mrb[0].mxu0
    %v463 = vadd.f32 %v111, %v462
    %464 = vdwg.mxu0
    %v465 = vpack.c.bf16 %v391, %v387
    %v466 = vpack.c.bf16 %v393, %v389
    %v467 = vpack.c.bf16 %v401, %v397
    %v468 = vpack.c.bf16 %v403, %v399
    %v469 = vpack.c.bf16 %v411, %v407
    %v470 = vpack.c.bf16 %v413, %v409
    %v471 = vpack.c.bf16 %v421, %v417
    %v472 = vpack.c.bf16 %v423, %v419
    %v473 = vpack.c.bf16 %v431, %v427
    %v474 = vpack.c.bf16 %v433, %v429
    %v475 = vpack.c.bf16 %v441, %v437
    %v476 = vpack.c.bf16 %v443, %v439
    %v477 = vpack.c.bf16 %v451, %v447
    %v478 = vpack.c.bf16 %v453, %v449
    %v479 = vpack.c.bf16 %v461, %v457
    %v480 = vpack.c.bf16 %v463, %v459
    %v497 = vunpack.c.l.b16 %v465
    %v498 = vunpack.c.l.b16 %v466
    %v499 = vunpack.c.h.b16 %v465
    %v500 = vunpack.c.h.b16 %v466
    %v501 = vunpack.c.l.b16 %v467
    %v502 = vunpack.c.l.b16 %v468
    %v503 = vunpack.c.h.b16 %v467
    %v504 = vunpack.c.h.b16 %v468
    %v505 = vunpack.c.l.b16 %v469
    %v506 = vunpack.c.l.b16 %v470
    %v507 = vunpack.c.h.b16 %v469
    %v508 = vunpack.c.h.b16 %v470
    %v509 = vunpack.c.l.b16 %v471
    %v510 = vunpack.c.l.b16 %v472
    %v511 = vunpack.c.h.b16 %v471
    %v512 = vunpack.c.h.b16 %v472
    %v513 = vunpack.c.l.b16 %v473
    %v514 = vunpack.c.l.b16 %v474
    %v515 = vunpack.c.h.b16 %v473
    %v516 = vunpack.c.h.b16 %v474
    %v517 = vunpack.c.l.b16 %v475
    %v518 = vunpack.c.l.b16 %v476
    %v519 = vunpack.c.h.b16 %v475
    %v520 = vunpack.c.h.b16 %v476
    %v521 = vunpack.c.l.b16 %v477
    %v522 = vunpack.c.l.b16 %v478
    %v523 = vunpack.c.h.b16 %v477
    %v524 = vunpack.c.h.b16 %v478
    %v525 = vunpack.c.l.b16 %v479
    %v526 = vunpack.c.l.b16 %v480
    %v527 = vunpack.c.h.b16 %v479
    %v528 = vunpack.c.h.b16 %v480
    %v529 = vpack.c.b16 %v498, %v497
    %v530 = vpack.c.b16 %v500, %v499
    %v531 = vpack.c.b16 %v502, %v501
    %v532 = vpack.c.b16 %v504, %v503
    %v533 = vpack.c.b16 %v506, %v505
    %v534 = vpack.c.b16 %v508, %v507
    %v535 = vpack.c.b16 %v510, %v509
    %v536 = vpack.c.b16 %v512, %v511
    %v537 = vpack.c.b16 %v514, %v513
    %v538 = vpack.c.b16 %v516, %v515
    %v539 = vpack.c.b16 %v518, %v517
    %v540 = vpack.c.b16 %v520, %v519
    %v541 = vpack.c.b16 %v522, %v521
    %v542 = vpack.c.b16 %v524, %v523
    %v543 = vpack.c.b16 %v526, %v525
    %v544 = vpack.c.b16 %v528, %v527
    %561 = vst [vmem:[#allocation7] sm:$0xff] %v529
    %562 = vst [vmem:[#allocation7 + $0x8] sm:$0xff] %v530
    %563 = vst [vmem:[#allocation7 + $0x10] sm:$0xff] %v531
    %564 = vst [vmem:[#allocation7 + $0x18] sm:$0xff] %v532
    %565 = vst [vmem:[#allocation7 + $0x20] sm:$0xff] %v533
    %566 = vst [vmem:[#allocation7 + $0x28] sm:$0xff] %v534
    %567 = vst [vmem:[#allocation7 + $0x30] sm:$0xff] %v535
    %568 = vst [vmem:[#allocation7 + $0x38] sm:$0xff] %v536
    %569 = vst [vmem:[#allocation7 + $0x40] sm:$0xff] %v537
    %570 = vst [vmem:[#allocation7 + $0x48] sm:$0xff] %v538
    %571 = vst [vmem:[#allocation7 + $0x50] sm:$0xff] %v539
    %572 = vst [vmem:[#allocation7 + $0x58] sm:$0xff] %v540
    %573 = vst [vmem:[#allocation7 + $0x60] sm:$0xff] %v541
    %574 = vst [vmem:[#allocation7 + $0x68] sm:$0xff] %v542
    %575 = vst [vmem:[#allocation7 + $0x70] sm:$0xff] %v543
    %576 = vst [vmem:[#allocation7 + $0x78] sm:$0xff] %v544
    // Predicated region
    $region22: #{tpu_custom_call.1} parent=1 // pred_check
      _
    $region23: #{tpu_custom_call.1} parent=1 // pred_check_branch
      %578 = sbr.rel (0) target = $region25
    $region24: #{tpu_custom_call.1} parent=1 // pred_region
      %s580 = ssub.s32 2048, 2048
      %581 = vsyncadd [#allocation4], %s580
      %s582 = sshll.u32 [#allocation7], 4
      %s583 = int_to_ptr.vmem [resolvable:$true] %s582
      %588 = dma.vmem_to_hbm [thread:$0]  %s583, 2048, %s3, [#allocation4], 128, 128, 8
    $region25: #{tpu_custom_call.1} parent=1 // pred_fallthru
      _
    // Predicated region
    $region26: #{tpu_custom_call.1} parent=1 // pred_check
      _
    $region27: #{tpu_custom_call.1} parent=1 // pred_check_branch
      %590 = sbr.rel (0) target = $region29
    $region28: #{tpu_custom_call.1} parent=1 // pred_region
      %591 = dma.done [#allocation4], 2048
    $region29: #{tpu_custom_call.1} parent=1 // pred_fallthru
      _
    %592 = vsyncpa [#allocation3], 1
    %593 = vsyncpa [#allocation6], 1
    %594 = vsyncpa [#allocation4], 1

</llo_original>
